<compile_context>
chip_gen: v6e
topology: v6e:2x2x1
jax: 0.10.0
libtpu: 0.0.40
codegen_flags: <defaults>
</compile_context>

<pallas_src>
import math

import jax
import jax.numpy as jnp
from jax import lax
from jax.experimental import pallas as pl
from jax.experimental.pallas import tpu as pltpu


# ----------------------------- Pallas kernel ---------------------------------
def _styleconv_kernel(nw_ref, w_ref, p_ref, noise_ref, bias_ref, out_ref):
    """One grid step == (batch element b, spatial tile s).

    Refs:
      nw_ref    : SMEM (1,)                  -- scalar noise weight
      w_ref     : VMEM (1, Cout, CKK)  bf16  -- modulated+demodulated weight, taps flattened
      p_ref     : VMEM (1, CKK, THW)   bf16  -- im2col patches for this spatial tile
      noise_ref : VMEM (1, 1, THW)     f32   -- lane-dense noise tile
      bias_ref  : VMEM (Cout, 1)       f32
      out_ref   : VMEM (1, Cout, THW)  f32   -- flattened-NCHW output tile
    """
    # Single deep GEMM: (Cout, CKK) @ (CKK, THW) -> (Cout, THW); bf16 MXU inputs, f32 accumulate.
    acc = jnp.dot(w_ref[0], p_ref[0], preferred_element_type=jnp.float32)
    out = acc * jnp.float32(math.sqrt(2.0))                      # StyleConv's * 2**0.5 gain
    out = out + nw_ref[0] * noise_ref[0]                         # (1, THW) broadcasts over rows
    out = out + bias_ref[...]                                    # (Cout, 1) broadcasts over lanes
    out = jnp.where(out >= 0.0, out, jnp.float32(0.2) * out)     # LeakyReLU(0.2)
    out_ref[0] = out.astype(out_ref.dtype)


def _pick_tile_hw(hw):
    """Largest lane-dense (multiple-of-128) spatial tile <= 2048 that divides H*W."""
    for t in (2048, 1024, 512, 256, 128):
        if hw % t == 0:
            return t
    return hw


def _styleconv_pallas(w_bc_ckk, patches, noise_b1hw, bias_c1, noise_weight, tile_hw):
    B, Cout, CKK = w_bc_ckk.shape
    HW = patches.shape[2]
    assert HW % tile_hw == 0
    n_hw = HW // tile_hw

    grid_spec = pltpu.PrefetchScalarGridSpec(
        num_scalar_prefetch=0,
        grid=(B, n_hw),
        in_specs=[
            pl.BlockSpec(memory_space=pltpu.MemorySpace.SMEM),                # noise weight
            pl.BlockSpec((1, Cout, CKK), lambda b, s: (b, 0, 0)),             # weights (bf16)
            pl.BlockSpec((1, CKK, tile_hw), lambda b, s: (b, 0, s)),          # im2col patches (bf16)
            pl.BlockSpec((1, 1, tile_hw), lambda b, s: (b, 0, s)),            # noise (lane-dense)
            pl.BlockSpec((Cout, 1), lambda b, s: (0, 0)),                     # bias
        ],
        out_specs=pl.BlockSpec((1, Cout, tile_hw), lambda b, s: (b, 0, s)),   # flat-NCHW output
    )

    return pl.pallas_call(
        _styleconv_kernel,
        out_shape=jax.ShapeDtypeStruct((B, Cout, HW), jnp.float32),
        grid_spec=grid_spec,
        compiler_params=pltpu.CompilerParams(
            dimension_semantics=("parallel", "parallel"),
            vmem_limit_bytes=32 * 1024 * 1024,
        ),
    )(noise_weight, w_bc_ckk, patches, noise_b1hw, bias_c1)


# ----------------------------- StyleConv wrapper ------------------------------
class StyleConvParams:
    """Deterministic synthetic parameters mirroring StyleConv.__init__ shapes."""

    def __init__(self, key, in_channels, out_channels, kernel_size, num_style_feat):
        k1, k2 = jax.random.split(key, 2)
        self.in_channels = in_channels
        self.out_channels = out_channels
        self.kernel_size = kernel_size
        self.eps = 1e-8
        # nn.Linear(num_style_feat, in_channels) -- kaiming-ish init, bias filled with 1
        self.mod_w = jax.random.normal(k1, (in_channels, num_style_feat),
                                       jnp.float32) / math.sqrt(num_style_feat)
        self.mod_b = jnp.ones((in_channels,), jnp.float32)
        # conv weight: randn(1, out, in, k, k) / sqrt(in * k^2)
        self.conv_w = jax.random.normal(
            k2, (1, out_channels, in_channels, kernel_size, kernel_size), jnp.float32
        ) / math.sqrt(in_channels * kernel_size ** 2)
        # StyleConv: noise weight = zeros(1), bias = zeros(1, out, 1, 1)
        self.noise_weight = jnp.zeros((1,), jnp.float32)
        self.bias = jnp.zeros((1, out_channels, 1, 1), jnp.float32)


def _modulate_weights(params, style):
    """Per-sample modulated + demodulated conv weights, (B, Cout, Cin, K, K)."""
    style_mod = style @ params.mod_w.T + params.mod_b                       # (B, Cin)
    w = params.conv_w[0]                                                    # (Cout, Cin, K, K)
    w_mod = w[None] * style_mod[:, None, :, None, None]                     # (B, Cout, Cin, K, K)
    demod = lax.rsqrt(jnp.sum(w_mod ** 2, axis=(2, 3, 4)) + params.eps)     # (B, Cout)
    return w_mod * demod[:, :, None, None, None]


def style_conv_forward(params: StyleConvParams, x_nchw, style, noise_nchw, tile_hw=None):
    """Matches StyleConv.forward(x, style, noise) with sample_mode=None, demodulate=True."""
    B, Cin, H, W = x_nchw.shape
    K = params.kernel_size
    pad = K // 2
    Cout = params.out_channels
    HW = H * W

    # --- parameter modulation glue (small) ---
    w_mod = _modulate_weights(params, style)                                # (B, Cout, Cin, K, K)
    w_flat = w_mod.reshape(B, Cout, Cin * K * K).astype(jnp.bfloat16)       # bf16 MXU feed

    # --- im2col, NCHW-native: (B, Cin*K*K, H*W); spatial on the lane axis ---
    x_pad = jnp.pad(x_nchw.astype(jnp.float32),
                    ((0, 0), (0, 0), (pad, pad), (pad, pad)))
    views = [x_pad[:, :, kh:kh + H, kw:kw + W]
             for kh in range(K) for kw in range(K)]                         # K*K x (B, Cin, H, W)
    patches = jnp.stack(views, axis=2)                                      # (B, Cin, K*K, H, W)
    patches = patches.reshape(B, Cin * K * K, HW).astype(jnp.bfloat16)

    noise_flat = noise_nchw.reshape(B, 1, HW).astype(jnp.float32)           # lane-dense, no transpose
    bias_c1 = params.bias.reshape(Cout, 1).astype(jnp.float32)

    if tile_hw is None:
        tile_hw = _pick_tile_hw(HW)

    out_flat = _styleconv_pallas(w_flat, patches, noise_flat, bias_c1,
                                 params.noise_weight.astype(jnp.float32), tile_hw)
    return out_flat.reshape(B, Cout, H, W)                                  # flat NCHW -> NCHW (free)


# ----------------------------- pure-JAX reference -----------------------------
def style_conv_reference(params: StyleConvParams, x_nchw, style, noise_nchw,
                         conv_input_dtype=jnp.float32):
    """Reference forward. conv_input_dtype=bf16 mimics the kernel's bf16 MXU inputs."""
    B, C, H, W = x_nchw.shape
    K = params.kernel_size
    pad = K // 2

    w_mod = _modulate_weights(params, style)
    x_c = x_nchw.astype(conv_input_dtype).astype(jnp.float32)
    w_c = w_mod.astype(conv_input_dtype).astype(jnp.float32)

    outs = []
    for b in range(B):
        outs.append(lax.conv_general_dilated(
            x_c[b:b + 1], w_c[b],
            window_strides=(1, 1), padding=((pad, pad), (pad, pad)),
            dimension_numbers=("NCHW", "OIHW", "NCHW"),
            precision=lax.Precision.HIGHEST))
    out = jnp.concatenate(outs, axis=0) * math.sqrt(2.0)
    out = out + params.noise_weight[0] * noise_nchw
    out = out + params.bias
    return jnp.where(out >= 0.0, out, 0.2 * out)


# ----------------------------------- main --------------------------------------
if __name__ == "__main__":
    B, Cin, Cout, K, NSF, H, W = 2, 4, 4, 3, 8, 16, 16

    key = jax.random.PRNGKey(0)
    kp, kx, ks, kn, kb = jax.random.split(key, 5)

    params = StyleConvParams(kp, Cin, Cout, K, NSF)
    # Perturb the (init-to-zero) learnable noise weight / bias so those paths are exercised.
    params.noise_weight = jnp.full((1,), 0.1, jnp.float32)
    params.bias = 0.05 * jax.random.normal(kb, (1, Cout, 1, 1), jnp.float32)

    x = jax.random.normal(kx, (B, Cin, H, W), jnp.float32)       # NCHW, like PyTorch
    style = jax.random.normal(ks, (B, NSF), jnp.float32)
    noise = jax.random.normal(kn, (B, 1, H, W), jnp.float32)     # deterministic noise

    # tile_hw=128 -> grid (B, 2): exercises both the batch and spatial grid axes.
    out = jax.block_until_ready(style_conv_forward(params, x, style, noise, tile_hw=128))

    # Tight check against a reference that also rounds conv inputs to bf16 (validates kernel math).
    ref_bf16 = jax.block_until_ready(
        style_conv_reference(params, x, style, noise, conv_input_dtype=jnp.bfloat16))
    # Loose check against the full-f32 reference (validates bf16 MXU inputs are acceptable).
    ref_f32 = jax.block_until_ready(style_conv_reference(params, x, style, noise))

    assert out.shape == (B, Cout, H, W), out.shape
    assert jnp.allclose(out, ref_bf16, atol=1e-4, rtol=1e-4), \
        float(jnp.max(jnp.abs(out - ref_bf16)))
    assert jnp.allclose(out, ref_f32, atol=3e-2, rtol=3e-2), \
        float(jnp.max(jnp.abs(out - ref_f32)))
    print("KERNEL_OK")
</pallas_src>

<mosaic_0001>
module attributes {stable_mosaic.version = 11 : i64} {
  func.func @_styleconv_kernel(%arg0: i32, %arg1: i32, %arg2: memref<1xf32, #tpu.memory_space<smem>>, %arg3: memref<1x4x36xbf16, #tpu.memory_space<vmem>>, %arg4: memref<1x36x128xbf16, #tpu.memory_space<vmem>>, %arg5: memref<1x1x128xf32, #tpu.memory_space<vmem>>, %arg6: memref<4x1xf32, #tpu.memory_space<vmem>>, %arg7: memref<1x4x128xf32, #tpu.memory_space<vmem>>) attributes {dimension_semantics = [#tpu.dimension_semantics<parallel>, #tpu.dimension_semantics<parallel>], iteration_bounds = array<i64: 2, 2>, scalar_prefetch = 0 : i64, scratch_operands = 0 : i64, tpu.core_type = #tpu.core_type<tc>, window_params = [{transform_indices = @transform_0, window_bounds = array<i64: 1>}, {transform_indices = @transform_1, window_bounds = array<i64: 1, 4, 36>}, {transform_indices = @transform_2, window_bounds = array<i64: 1, 36, 128>}, {transform_indices = @transform_3, window_bounds = array<i64: 1, 1, 128>}, {pipeline_mode = #tpu.pipeline_mode<synchronous>, transform_indices = @transform_4, window_bounds = array<i64: 4, 1>}, {transform_indices = @transform_5, window_bounds = array<i64: 1, 4, 128>}]} {
    %c0 = arith.constant 0 : index
    %c0_0 = arith.constant 0 : index
    %c0_1 = arith.constant 0 : index
    %0 = vector.load %arg3[%c0, %c0_0, %c0_1] : memref<1x4x36xbf16, #tpu.memory_space<vmem>>, vector<1x4x36xbf16>
    %1 = vector.shape_cast %0 : vector<1x4x36xbf16> to vector<4x36xbf16>
    %c0_2 = arith.constant 0 : index
    %c0_3 = arith.constant 0 : index
    %c0_4 = arith.constant 0 : index
    %2 = vector.load %arg4[%c0_2, %c0_3, %c0_4] : memref<1x36x128xbf16, #tpu.memory_space<vmem>>, vector<1x36x128xbf16>
    %3 = vector.shape_cast %2 : vector<1x36x128xbf16> to vector<36x128xbf16>
    %cst = arith.constant dense<0.000000e+00> : vector<4x128xf32>
    %4 = tpu.matmul %1, %3, %cst {dimension_numbers = #tpu.dot_dimension_numbers<[1], [0], [0], [1], [0, 0, 1, 1], [], []>} : vector<4x36xbf16>, vector<36x128xbf16>, vector<4x128xf32> -> vector<4x128xf32>
    %cst_5 = arith.constant 1.41421354 : f32
    %5 = vector.broadcast %cst_5 : f32 to vector<4x128xf32>
    %6 = arith.mulf %4, %5 : vector<4x128xf32>
    %c0_6 = arith.constant 0 : index
    %7 = memref.load %arg2[%c0_6] : memref<1xf32, #tpu.memory_space<smem>>
    %c0_7 = arith.constant 0 : index
    %c0_8 = arith.constant 0 : index
    %c0_9 = arith.constant 0 : index
    %8 = vector.load %arg5[%c0_7, %c0_8, %c0_9] : memref<1x1x128xf32, #tpu.memory_space<vmem>>, vector<1x1x128xf32>
    %9 = vector.shape_cast %8 : vector<1x1x128xf32> to vector<1x128xf32>
    %10 = vector.broadcast %7 : f32 to vector<1x128xf32>
    %11 = arith.mulf %10, %9 : vector<1x128xf32>
    %12 = vector.broadcast %11 : vector<1x128xf32> to vector<4x128xf32>
    %13 = arith.addf %6, %12 : vector<4x128xf32>
    %c0_10 = arith.constant 0 : index
    %c0_11 = arith.constant 0 : index
    %14 = vector.load %arg6[%c0_10, %c0_11] : memref<4x1xf32, #tpu.memory_space<vmem>>, vector<4x1xf32>
    %15 = vector.broadcast %14 : vector<4x1xf32> to vector<4x128xf32>
    %16 = arith.addf %13, %15 : vector<4x128xf32>
    %cst_12 = arith.constant 0.000000e+00 : f32
    %17 = vector.broadcast %cst_12 : f32 to vector<4x128xf32>
    %18 = arith.cmpf oge, %16, %17 : vector<4x128xf32>
    %cst_13 = arith.constant 2.000000e-01 : f32
    %19 = vector.broadcast %cst_13 : f32 to vector<4x128xf32>
    %20 = arith.mulf %19, %16 : vector<4x128xf32>
    %21 = arith.select %18, %16, %20 : vector<4x128xi1>, vector<4x128xf32>
    %c0_14 = arith.constant 0 : index
    %c0_15 = arith.constant 0 : index
    %c0_16 = arith.constant 0 : index
    %22 = vector.load %arg7[%c0_14, %c0_15, %c0_16] : memref<1x4x128xf32, #tpu.memory_space<vmem>>, vector<1x4x128xf32>
    %23 = vector.shape_cast %22 : vector<1x4x128xf32> to vector<4x128xf32>
    %24 = vector.shape_cast %21 : vector<4x128xf32> to vector<1x4x128xf32>
    tpu.vector_store %arg7[%c0_14, %c0_15, %c0_16], %24 {strides = array<i32>} : memref<1x4x128xf32, #tpu.memory_space<vmem>>, vector<1x4x128xf32>,
    return
  }
  func.func @transform_0(%arg0: i32, %arg1: i32) -> i32 {
    %c0_i32 = arith.constant 0 : i32
    %c0_i32_0 = arith.constant 0 : i32
    return %c0_i32 : i32
  }
  func.func @transform_1(%arg0: i32, %arg1: i32) -> (i32, i32, i32) {
    %c0_i32 = arith.constant 0 : i32
    %c0_i32_0 = arith.constant 0 : i32
    %c0_i32_1 = arith.constant 0 : i32
    return %arg0, %c0_i32, %c0_i32_0 : i32, i32, i32
  }
  func.func @transform_2(%arg0: i32, %arg1: i32) -> (i32, i32, i32) {
    %c0_i32 = arith.constant 0 : i32
    %c0_i32_0 = arith.constant 0 : i32
    return %arg0, %c0_i32, %arg1 : i32, i32, i32
  }
  func.func @transform_3(%arg0: i32, %arg1: i32) -> (i32, i32, i32) {
    %c0_i32 = arith.constant 0 : i32
    %c0_i32_0 = arith.constant 0 : i32
    return %arg0, %c0_i32, %arg1 : i32, i32, i32
  }
  func.func @transform_4(%arg0: i32, %arg1: i32) -> (i32, i32) {
    %c0_i32 = arith.constant 0 : i32
    %c0_i32_0 = arith.constant 0 : i32
    %c0_i32_1 = arith.constant 0 : i32
    return %c0_i32, %c0_i32_0 : i32, i32
  }
  func.func @transform_5(%arg0: i32, %arg1: i32) -> (i32, i32, i32) {
    %c0_i32 = arith.constant 0 : i32
    %c0_i32_0 = arith.constant 0 : i32
    return %arg0, %c0_i32, %arg1 : i32, i32, i32
  }
}

</mosaic_0001>

<llo_original>
// kernel: tpu_custom_call.1
$region0: #{tpu_custom_call.1}
  #allocation0 [shape = 'u32[]', space=smem, size = 0x4, offset = 0x4, fixed_abs, tag = 'smem constant byte address 0x4 - core index']
  #allocation1 [shape = 'u32[144,128]{1,0:T(1,128)}', space=vmem, size = 0x12000, scoped, tag = 'internal scratch']
  #allocation2 [shape = 'f32[1]{0:T(128)S(6)}', space=smem, size = 0x200, scoped, tag = 'scoped memory for tpu_custom_call.1']
  %s0 = inlined_call_operand.<no memory space> [shape: f32[1], index: 0, kind: input, shape index: {}]
  %s1 = inlined_call_operand.vmem [shape: bf16[2,4,36], index: 1, kind: input, shape index: {}]
  %s2 = inlined_call_operand.vmem [shape: bf16[2,36,256], index: 2, kind: input, shape index: {}]
  %s3 = inlined_call_operand.vmem [shape: f32[2,1,256], index: 3, kind: input, shape index: {}]
  %s4 = inlined_call_operand.vmem [shape: f32[4,1], index: 4, kind: input, shape index: {}]
  %s5 = inlined_call_operand.hbm [shape: f32[2,4,256], index: 5, kind: output, shape index: {}]
  %s6 = sld [smem:[#allocation0]]
  $region94: #{tpu_custom_call.1} parent=0
    _
  %s8 = ssub.s32 1, %s6
  %s9 = scalar_select 0, %s8, %s6
  %10 = sst [smem:[#allocation2]] %s0
  $region1: #{tpu_custom_call.1} parent=0
    #allocation3 [shape = 'u8[20480]{0}', space=vmem, size = 0x5000, scoped, tag = 'input window, operand 2']
    #allocation4 [shape = 'u8[4096]{0}', space=vmem, size = 0x1000, scoped, tag = 'output window, operand 0']
    #allocation5 [shape = 's32[2]{0}', space=sflag, size = 0x8, scoped, tag = 'scoped memory for tpu_custom_call.1']
    %11 = vsyncpa [#allocation5], 0
    %s12 = scalar_lea.sflag [#allocation5], 1
    %13 = vsyncpa %s12, 0
    loop: start=0, step=1, limit=6
    $region2: #{tpu_custom_call.1} parent=1 // loop_pre_header
      _
    $region3: #{tpu_custom_call.1} parent=1 // loop_header
      %s15 = sphi 0, %s19
      %p16 = scmp.ge.s32.totalorder %s15, 6
      %s22 = sphi 0, %s34
      %s23 = sphi 0, %s30
      %s24 = sphi 0, %s22
      %s25 = sphi 0, %s23
      %s26 = sphi 0, %s24
      %s27 = sphi 0, %s25
      %s35 = sphi 0, %s35
      %s37 = sphi 0, %s35
      %s38 = sphi 0, %s37
      %s52 = sphi 0, %s38
      %s58 = sphi 0, %s60
      %s61 = sphi 0, %s58
      %s62 = sphi 0, %s61
      %s78 = sphi 0, %s62
      %s86 = sphi 0, %s88
      %s89 = sphi 0, %s86
      %s90 = sphi 0, %s89
      %s106 = sphi 0, %s90
      %s114 = sphi 0, %s116
      %s117 = sphi 0, %s114
      %s118 = sphi 0, %s117
      %s134 = sphi 0, %s118
      %s138 = sphi 0, %s138
      %s140 = sphi 0, %s138
      %s141 = sphi 0, %s140
      %s155 = sphi 0, %s141
      %s163 = sphi 0, %s165
      %s166 = sphi 0, %s163
      %s167 = sphi 0, %s166
      %s183 = sphi 0, %s167
    $region4: #{tpu_custom_call.1} parent=1 // loop_header_branch
      %18 = sbr.rel (%p16) target = $region8
    $region5: #{tpu_custom_call.1} parent=1 // loop_body
      %s20 = ssub.s32 %s15, 1
      %s21 = ssub.s32 %s15, 2
      %s28 = sadd.s32 1, %s23
      %p29 = scmp.ge.s32.totalorder %s28, 2
      %s30 = scalar_select %p29, 0, %s28
      %s31 = sadd.s32 1, %s22
      %s32 = scalar_select %p29, %s31, %s22
      %p33 = scmp.ge.s32.totalorder %s32, 2
      %s34 = scalar_select %p33, 0, %s32
      %s36 = sadd.s32 %s35, 1
      %p39 = scmp.eq.s32.totalorder %s15, 3
      %p40 = scmp.ne.s32.totalorder %s35, %s37
      %p41 = scmp.eq.s32.totalorder %s15, 0
      %p42 = por %p40, %p41
      %p43 = scmp.ne.s32.totalorder %s35, %s37
      %p44 = scmp.eq.s32.totalorder %s20, 3
      %p45 = por %p43, %p44
      %p46 = scmp.ne.s32.totalorder %s37, %s38
      %p47 = scmp.eq.s32.totalorder %s20, 0
      %p48 = por %p46, %p47
      %p49 = scmp.ne.s32.totalorder %s37, %s38
      %p50 = scmp.eq.s32.totalorder %s21, 3
      %p51 = por %p49, %p50
      %p53 = scmp.ne.s32.totalorder %s38, %s52
      %p54 = scmp.eq.s32.totalorder %s21, 0
      %p55 = por %p53, %p54
      %s56 = ssub.s32 %s22, %s34
      %p57 = scmp.eq.s32.totalorder %s56, 0
      %s59 = sadd.s32 %s58, 1
      %s60 = scalar_select %p57, %s58, %s59
      %p63 = pneg %p57
      %p64 = scmp.eq.s32.totalorder %s15, 3
      %p65 = por %p63, %p64
      %p66 = scmp.ne.s32.totalorder %s58, %s61
      %p67 = scmp.eq.s32.totalorder %s15, 0
      %p68 = por %p66, %p67
      %p69 = scmp.ne.s32.totalorder %s58, %s61
      %p70 = scmp.eq.s32.totalorder %s20, 3
      %p71 = por %p69, %p70
      %p72 = scmp.ne.s32.totalorder %s61, %s62
      %p73 = scmp.eq.s32.totalorder %s20, 0
      %p74 = por %p72, %p73
      %p75 = scmp.ne.s32.totalorder %s61, %s62
      %p76 = scmp.eq.s32.totalorder %s21, 3
      %p77 = por %p75, %p76
      %p79 = scmp.ne.s32.totalorder %s62, %s78
      %p80 = scmp.eq.s32.totalorder %s21, 0
      %p81 = por %p79, %p80
      %s82 = ssub.s32 %s22, %s34
      %s83 = ssub.s32 %s23, %s30
      %s84 = sor.u32 %s82, %s83
      %p85 = scmp.eq.s32.totalorder %s84, 0
      %s87 = sadd.s32 %s86, 1
      %s88 = scalar_select %p85, %s86, %s87
      %p91 = pneg %p85
      %p92 = scmp.eq.s32.totalorder %s15, 3
      %p93 = por %p91, %p92
      %p94 = scmp.ne.s32.totalorder %s86, %s89
      %p95 = scmp.eq.s32.totalorder %s15, 0
      %p96 = por %p94, %p95
      %p97 = scmp.ne.s32.totalorder %s86, %s89
      %p98 = scmp.eq.s32.totalorder %s20, 3
      %p99 = por %p97, %p98
      %p100 = scmp.ne.s32.totalorder %s89, %s90
      %p101 = scmp.eq.s32.totalorder %s20, 0
      %p102 = por %p100, %p101
      %p103 = scmp.ne.s32.totalorder %s89, %s90
      %p104 = scmp.eq.s32.totalorder %s21, 3
      %p105 = por %p103, %p104
      %p107 = scmp.ne.s32.totalorder %s90, %s106
      %p108 = scmp.eq.s32.totalorder %s21, 0
      %p109 = por %p107, %p108
      %s110 = ssub.s32 %s22, %s34
      %s111 = ssub.s32 %s23, %s30
      %s112 = sor.u32 %s110, %s111
      %p113 = scmp.eq.s32.totalorder %s112, 0
      %s115 = sadd.s32 %s114, 1
      %s116 = scalar_select %p113, %s114, %s115
      %p119 = pneg %p113
      %p120 = scmp.eq.s32.totalorder %s15, 3
      %p121 = por %p119, %p120
      %p122 = scmp.ne.s32.totalorder %s114, %s117
      %p123 = scmp.eq.s32.totalorder %s15, 0
      %p124 = por %p122, %p123
      %p125 = scmp.ne.s32.totalorder %s114, %s117
      %p126 = scmp.eq.s32.totalorder %s20, 3
      %p127 = por %p125, %p126
      %p128 = scmp.ne.s32.totalorder %s117, %s118
      %p129 = scmp.eq.s32.totalorder %s20, 0
      %p130 = por %p128, %p129
      %p131 = scmp.ne.s32.totalorder %s117, %s118
      %p132 = scmp.eq.s32.totalorder %s21, 3
      %p133 = por %p131, %p132
      %p135 = scmp.ne.s32.totalorder %s118, %s134
      %p136 = scmp.eq.s32.totalorder %s21, 0
      %p137 = por %p135, %p136
      %s139 = sadd.s32 %s138, 1
      %p142 = scmp.eq.s32.totalorder %s15, 3
      %p143 = scmp.ne.s32.totalorder %s138, %s140
      %p144 = scmp.eq.s32.totalorder %s15, 0
      %p145 = por %p143, %p144
      %p146 = scmp.ne.s32.totalorder %s138, %s140
      %p147 = scmp.eq.s32.totalorder %s20, 3
      %p148 = por %p146, %p147
      %p149 = scmp.ne.s32.totalorder %s140, %s141
      %p150 = scmp.eq.s32.totalorder %s20, 0
      %p151 = por %p149, %p150
      %p152 = scmp.ne.s32.totalorder %s140, %s141
      %p153 = scmp.eq.s32.totalorder %s21, 3
      %p154 = por %p152, %p153
      %p156 = scmp.ne.s32.totalorder %s141, %s155
      %p157 = scmp.eq.s32.totalorder %s21, 0
      %p158 = por %p156, %p157
      %s159 = ssub.s32 %s22, %s34
      %s160 = ssub.s32 %s23, %s30
      %s161 = sor.u32 %s159, %s160
      %p162 = scmp.eq.s32.totalorder %s161, 0
      %s164 = sadd.s32 %s163, 1
      %s165 = scalar_select %p162, %s163, %s164
      %p168 = pneg %p162
      %p169 = scmp.eq.s32.totalorder %s15, 3
      %p170 = por %p168, %p169
      %p171 = scmp.ne.s32.totalorder %s163, %s166
      %p172 = scmp.eq.s32.totalorder %s15, 0
      %p173 = por %p171, %p172
      %p174 = scmp.ne.s32.totalorder %s163, %s166
      %p175 = scmp.eq.s32.totalorder %s20, 3
      %p176 = por %p174, %p175
      %p177 = scmp.ne.s32.totalorder %s166, %s167
      %p178 = scmp.eq.s32.totalorder %s20, 0
      %p179 = por %p177, %p178
      %p180 = scmp.ne.s32.totalorder %s166, %s167
      %p181 = scmp.eq.s32.totalorder %s21, 3
      %p182 = por %p180, %p181
      %p184 = scmp.ne.s32.totalorder %s167, %s183
      %p185 = scmp.eq.s32.totalorder %s21, 0
      %p186 = por %p184, %p185
      %p187 = scmp.le.s32.totalorder 1, %s15
      %p188 = scmp.lt.s32.totalorder %s15, 5
      %p189 = pnand %p187, %p188
      %p190 = pneg %p189
      // Predicated region
      $region9: #{tpu_custom_call.1} parent=5 // pred_check
        _
      $region10: #{tpu_custom_call.1} parent=5 // pred_check_branch
        %192 = sbr.rel (%p189) target = $region12
      $region11: #{tpu_custom_call.1} parent=5 // pred_region
        %s193 = ssub.s32 %s15, 1
        // Predicated region
        $region13: #{tpu_custom_call.1} parent=11 // pred_check
          %p194 = pneg %p48
        $region14: #{tpu_custom_call.1} parent=11 // pred_check_branch
          %196 = sbr.rel (%p194) target = $region16
        $region15: #{tpu_custom_call.1} parent=11 // pred_region
          _
        $region16: #{tpu_custom_call.1} parent=11 // pred_fallthru
          _
        // Predicated region
        $region17: #{tpu_custom_call.1} parent=11 // pred_check
          %p197 = pneg %p151
        $region18: #{tpu_custom_call.1} parent=11 // pred_check_branch
          %199 = sbr.rel (%p197) target = $region20
        $region19: #{tpu_custom_call.1} parent=11 // pred_region
          _
        $region20: #{tpu_custom_call.1} parent=11 // pred_fallthru
          _
      $region12: #{tpu_custom_call.1} parent=5 // pred_fallthru
        _
      %p200 = scmp.lt.s32.totalorder %s15, 4
      // Predicated region
      $region21: #{tpu_custom_call.1} parent=5 // pred_check
        %p201 = pneg %p200
      $region22: #{tpu_custom_call.1} parent=5 // pred_check_branch
        %203 = sbr.rel (%p201) target = $region24
      $region23: #{tpu_custom_call.1} parent=5 // pred_region
        // Predicated region
        $region25: #{tpu_custom_call.1} parent=23 // pred_check
          %p204 = pneg %p68
        $region26: #{tpu_custom_call.1} parent=23 // pred_check_branch
          %206 = sbr.rel (%p204) target = $region28
        $region27: #{tpu_custom_call.1} parent=23 // pred_region
          %p207 = scmp.lt.s32.totalorder %s22, 1
          %s208 = scalar_select %p207, %s22, 1
          %s209 = smul.addr %s208, 2
          %s210 = scalar_lea.vmem %s1, %s209
        $region28: #{tpu_custom_call.1} parent=23 // pred_fallthru
          _
        // Predicated region
        $region29: #{tpu_custom_call.1} parent=23 // pred_check
          %p211 = pneg %p96
        $region30: #{tpu_custom_call.1} parent=23 // pred_check_branch
          %213 = sbr.rel (%p211) target = $region32
        $region31: #{tpu_custom_call.1} parent=23 // pred_region
          %s214 = sand.u32 %s86, 1
          %s215 = sand.u32 %s86, 1
          %s216 = smul.addr %s215, 20
          %s217 = scalar_lea.vmem [#allocation3], %s216
          %s218 = smul.addr %s22, 10
          %s219 = sadd.s32 %s23, %s218
          %s220 = smul.addr %s219, 4
          %s221 = scalar_lea.vmem %s2, %s220
          // Predicated region
          $region33: #{tpu_custom_call.1} parent=31 // pred_check
            _
          $region34: #{tpu_custom_call.1} parent=31 // pred_check_branch
            %223 = sbr.rel (0) target = $region36
          $region35: #{tpu_custom_call.1} parent=31 // pred_region
            // Predicated region
            $region37: #{tpu_custom_call.1} parent=35 // pred_check
              _
            $region38: #{tpu_custom_call.1} parent=35 // pred_check_branch
              %225 = sbr.rel target = $region40
            $region39: #{tpu_custom_call.1} parent=35 // pred_region
              // Predicated region
              $region52: #{tpu_custom_call.1} parent=39 // pred_check
                _
              $region53: #{tpu_custom_call.1} parent=39 // pred_check_branch
                %249 = sbr.rel (0) target = $region55
              $region54: #{tpu_custom_call.1} parent=39 // pred_region
                loop: start=0, step=1, limit=1
                $region56: #{tpu_custom_call.1} parent=54 // loop_pre_header
                  _
                $region57: #{tpu_custom_call.1} parent=54 // loop_header
                  %s251 = sphi 0, %s255
                  %p252 = scmp.ge.s32.totalorder %s251, 1
                  %s256 = sphi %s221, %s221
                  %s257 = sphi %s217, %s217
                $region58: #{tpu_custom_call.1} parent=54 // loop_header_branch
                  %254 = sbr.rel (%p252) target = $region62
                $region59: #{tpu_custom_call.1} parent=54 // loop_body
                  _
                $region60: #{tpu_custom_call.1} parent=54 // loop_footer
                  %s255 = sadd.s32 1, %s251
                $region61: #{tpu_custom_call.1} parent=54 // loop_footer_branch
                  %250 = sbr.rel target = $region57
                $region62: #{tpu_custom_call.1} parent=54 // loop_exit
                  _
                %s259 = ssub.s32 16, 1
                loop: start=0, step=1, limit=1
                $region63: #{tpu_custom_call.1} parent=54 // loop_pre_header
                  _
                $region64: #{tpu_custom_call.1} parent=54 // loop_header
                  %s261 = sphi 0, %s265
                  %p262 = scmp.ge.s32.totalorder %s261, 1
                  %s266 = sphi %s221, %s221
                  %s267 = sphi %s217, %s217
                $region65: #{tpu_custom_call.1} parent=54 // loop_header_branch
                  %264 = sbr.rel (%p262) target = $region69
                $region66: #{tpu_custom_call.1} parent=54 // loop_body
                  %v268 = vld [vmem:[%s266] sm:%s259]
                  %269 = vst [vmem:[%s267] sm:%s259] %v268
                  %v270 = vld [vmem:[%s266 + $0x8] sm:%s259]
                  %271 = vst [vmem:[%s267 + $0x4] sm:%s259] %v270
                  %v272 = vld [vmem:[%s266 + $0x10] sm:%s259]
                  %273 = vst [vmem:[%s267 + $0x8] sm:%s259] %v272
                  %v274 = vld [vmem:[%s266 + $0x18] sm:%s259]
                  %275 = vst [vmem:[%s267 + $0xc] sm:%s259] %v274
                  %v276 = vld [vmem:[%s266 + $0x20] sm:%s259]
                  %277 = vst [vmem:[%s267 + $0x10] sm:%s259] %v276
                $region67: #{tpu_custom_call.1} parent=54 // loop_footer
                  %s265 = sadd.s32 1, %s261
                $region68: #{tpu_custom_call.1} parent=54 // loop_footer_branch
                  %260 = sbr.rel target = $region64
                $region69: #{tpu_custom_call.1} parent=54 // loop_exit
                  _
              $region55: #{tpu_custom_call.1} parent=39 // pred_fallthru
                _
            $region40: #{tpu_custom_call.1} parent=35 // pred_fallthru
              _
            // Predicated region
            $region41: #{tpu_custom_call.1} parent=35 // pred_check
              _
            $region42: #{tpu_custom_call.1} parent=35 // pred_check_branch
              %227 = sbr.rel (0) target = $region44
            $region43: #{tpu_custom_call.1} parent=35 // pred_region
              %s229 = ssub.s32 16, 1
              loop: start=0, step=1, limit=1
              $region45: #{tpu_custom_call.1} parent=43 // loop_pre_header
                _
              $region46: #{tpu_custom_call.1} parent=43 // loop_header
                %s231 = sphi 0, %s235
                %p232 = scmp.ge.s32.totalorder %s231, 1
                %s236 = sphi %s221, %s221
                %s237 = sphi %s217, %s217
              $region47: #{tpu_custom_call.1} parent=43 // loop_header_branch
                %234 = sbr.rel (%p232) target = $region51
              $region48: #{tpu_custom_call.1} parent=43 // loop_body
                %v238 = vld [vmem:[%s236] sm:%s229]
                %239 = vst [vmem:[%s237] sm:%s229] %v238
                %v240 = vld [vmem:[%s236 + $0x8] sm:%s229]
                %241 = vst [vmem:[%s237 + $0x4] sm:%s229] %v240
                %v242 = vld [vmem:[%s236 + $0x10] sm:%s229]
                %243 = vst [vmem:[%s237 + $0x8] sm:%s229] %v242
                %v244 = vld [vmem:[%s236 + $0x18] sm:%s229]
                %245 = vst [vmem:[%s237 + $0xc] sm:%s229] %v244
                %v246 = vld [vmem:[%s236 + $0x20] sm:%s229]
                %247 = vst [vmem:[%s237 + $0x10] sm:%s229] %v246
              $region49: #{tpu_custom_call.1} parent=43 // loop_footer
                %s235 = sadd.s32 1, %s231
              $region50: #{tpu_custom_call.1} parent=43 // loop_footer_branch
                %230 = sbr.rel target = $region46
              $region51: #{tpu_custom_call.1} parent=43 // loop_exit
                _
            $region44: #{tpu_custom_call.1} parent=35 // pred_fallthru
              _
          $region36: #{tpu_custom_call.1} parent=31 // pred_fallthru
            _
          %278 = vnop
        $region32: #{tpu_custom_call.1} parent=23 // pred_fallthru
          _
        // Predicated region
        $region70: #{tpu_custom_call.1} parent=23 // pred_check
          %p279 = pneg %p124
        $region71: #{tpu_custom_call.1} parent=23 // pred_check_branch
          %281 = sbr.rel (%p279) target = $region73
        $region72: #{tpu_custom_call.1} parent=23 // pred_region
          %p282 = scmp.lt.s32.totalorder %s22, 1
          %s283 = scalar_select %p282, %s22, 1
          %p284 = scmp.lt.s32.totalorder %s23, 1
          %s285 = scalar_select %p284, %s23, 1
          %s286 = smul.addr %s283, 2
          %s287 = sadd.s32 %s285, %s286
          %s288 = scalar_lea.vmem %s3, %s287
        $region73: #{tpu_custom_call.1} parent=23 // pred_fallthru
          _
      $region24: #{tpu_custom_call.1} parent=5 // pred_fallthru
        _
      %p289 = scmp.le.s32.totalorder 1, %s15
      %p290 = scmp.lt.s32.totalorder %s15, 5
      %p291 = pnand %p289, %p290
      %p292 = pneg %p291
      // Predicated region
      $region74: #{tpu_custom_call.1} parent=5 // pred_check
        _
      $region75: #{tpu_custom_call.1} parent=5 // pred_check_branch
        %294 = sbr.rel (%p291) target = $region77
      $region76: #{tpu_custom_call.1} parent=5 // pred_region
        %s295 = ssub.s32 %s15, 1
        %s296 = sand.u32 %s89, 1
        %s297 = sand.u32 %s89, 1
        %s298 = smul.addr %s297, 20
        %s299 = scalar_lea.vmem [#allocation3], %s298
        // Predicated region
        $region78: #{tpu_custom_call.1} parent=76 // pred_check
          %p300 = pneg %p102
        $region79: #{tpu_custom_call.1} parent=76 // pred_check_branch
          %302 = sbr.rel (%p300) target = $region81
        $region80: #{tpu_custom_call.1} parent=76 // pred_region
          _
        $region81: #{tpu_custom_call.1} parent=76 // pred_fallthru
          _
        %p303 = pneg %p48
        %p304 = pneg %p45
        %p305 = scmp.lt.s32.totalorder %s24, 1
        %s306 = scalar_select %p305, %s24, 1
        %s307 = smul.addr %s306, 2
        %s308 = scalar_lea.vmem %s1, %s307
        %p309 = pneg %p74
        %p310 = pneg %p71
        %s311 = sand.u32 %s89, 1
        %s312 = sand.u32 %s89, 1
        %s313 = smul.addr %s312, 20
        %s314 = scalar_lea.vmem [#allocation3], %s313
        %p315 = pneg %p102
        %p316 = pneg %p99
        %p317 = scmp.lt.s32.totalorder %s24, 1
        %s318 = scalar_select %p317, %s24, 1
        %p319 = scmp.lt.s32.totalorder %s25, 1
        %s320 = scalar_select %p319, %s25, 1
        %s321 = smul.addr %s318, 2
        %s322 = sadd.s32 %s320, %s321
        %s323 = scalar_lea.vmem %s3, %s322
        %p324 = pneg %p130
        %p325 = pneg %p127
        %p326 = pneg %p151
        %p327 = pneg %p148
        %p328 = pneg %p179
        %p329 = pneg %p176
        %s330 = sand.u32 %s166, 1
        %s331 = scalar_lea.sflag [#allocation5], %s330
        %s332 = sand.u32 %s166, 1
        %s333 = smul.addr %s332, 4
        %s334 = scalar_lea.vmem [#allocation4], %s333
        %p335 = scmp.lt.s32.totalorder %s24, 1
        %s336 = scalar_select %p335, %s24, 1
        %s337 = smul.addr %s336, 2
        %s338 = scalar_lea.vmem %s1, %s337
        %p339 = scmp.lt.s32.totalorder %s24, 1
        %s340 = scalar_select %p339, %s24, 1
        %p341 = scmp.lt.s32.totalorder %s25, 1
        %s342 = scalar_select %p341, %s25, 1
        %s343 = smul.addr %s340, 2
        %s344 = sadd.s32 %s342, %s343
        %s345 = scalar_lea.vmem %s3, %s344
        %v347 = vld [vmem:[%s338] sm:$0x3]
        %v348 = vld [vmem:[%s299] sm:$0xf]
        %v349 = vld [vmem:[%s299 + $0x4] sm:$0xf]
        %v350 = vld [vmem:[%s299 + $0x8] sm:$0xf]
        %v351 = vld [vmem:[%s299 + $0xc] sm:$0xf]
        %v352 = vld [vmem:[%s299 + $0x10] sm:$0x3]
        %v358 = vunpack.c.l.b16 %v348
        %v359 = vunpack.c.l.b16 %v349
        %v360 = vunpack.c.l.b16 %v350
        %v361 = vunpack.c.l.b16 %v351
        %v362 = vunpack.c.l.b16 %v352
        %v363 = vpack.c.b16 %v359, %v358
        %v364 = vpack.c.b16 %v361, %v360
        %v365 = vpack.c.b16 %v362, %v362
        %vm368 = vcmask 293888
        %v370 = vsel %vm368, %v347, 0
        %vm372 = vcmask 1041408
        %v374 = vsel %vm372, %v365, 0
        %376 = vmatprep.subr.bf16.mxu0 0
        %377 = vmatpush1.bf16.msra.mxu0 0
        %378 = vmatprep.subr.bf16.mxu0 0
        %379 = vmatpush1.bf16.msra.mxu0 0
        %380 = vmatprep.subr.bf16.mxu0 0
        %381 = vmatpush1.bf16.msra.mxu0 0
        %382 = vmatprep.subr.bf16.mxu0 0
        %383 = vmatpush1.bf16.msra.mxu0 0
        %384 = vmatprep.subr.bf16.mxu0 0
        %385 = vmatpush1.bf16.msra.mxu0 0
        %386 = vmatprep.subr.bf16.mxu0 0
        %387 = vmatpush1.bf16.msra.mxu0 %v374
        %388 = vmatprep.subr.bf16.mxu0 0
        %389 = vmatpush1.bf16.msra.mxu0 %v364
        %390 = vmatprep.subr.bf16.mxu0 0
        %391 = vmatpush1.bf16.msra.mxu0 %v363
        %392 = vmatprep.subr.bf16.mxu0 0
        %393 = vmatpush2.bf16.msra.mxu0 0
        %394 = vmatprep.subr.bf16.mxu0 0
        %395 = vmatpush2.bf16.msra.mxu0 0
        %396 = vmatprep.subr.bf16.mxu0 0
        %397 = vmatpush2.bf16.msra.mxu0 0
        %398 = vmatprep.subr.bf16.mxu0 0
        %399 = vmatpush2.bf16.msra.mxu0 0
        %400 = vmatprep.subr.bf16.mxu0 0
        %401 = vmatpush2.bf16.msra.mxu0 0
        %402 = vmatprep.subr.bf16.mxu0 0
        %403 = vmatpush2.bf16.msra.mxu0 0
        %404 = vmatprep.subr.bf16.mxu0 0
        %405 = vmatpush2.bf16.msra.mxu0 0
        %406 = vmatprep.subr.bf16.mxu0 0
        %407 = vmatpush2.bf16.msra.mxu0 0
        %408 = vmatprep.mubr.bf16.mxu0 0
        %409 = vmatmul.mubr.bf16.gmra.mxu0 %v370
        %v410 = vpop.f32.mrf.mxu0
        %v411 = vadd.f32 0.0, %v410
        %v412 = vpop.f32.mrf.mxu0
        %v413 = vpop.f32.mrf.mxu0
        %v414 = vpop.f32.mrf.mxu0
        %415 = vdwg.mxu0
        %v416 = vmul.f32 %v411, 1.4142135
        %s417 = sld [smem:[#allocation2]]
        %v418 = vld [vmem:[%s345] sm:$0x1]
        %v419 = vstv %s417
        %v420 = vmul.f32 %v419, %v418
        %v422 = vlaneseq
        %v423 = vshrl.u32 %v422, 7
        %v424 = vsub.s32 0, %v423
        %v425 = vrot.slane %v420, %v424
        %v427 = vadd.f32 %v416, %v425
        %v428 = vld [vmem:[%s4] sm:$0xf]
        %430 = vset.pattern.permute.xlu0 0
        %431 = vperm.xlu0 %430, %v428
        %v432 = vpop.permute.xlu0 %431
        %v434 = vadd.f32 %v427, %v432
        %vm435 = vcmp.ge.f32.partialorder %v434, 0.0
        %v436 = vmul.f32 %v434, 0.2
        %v437 = vsel %vm435, %v434, %v436
        %438 = vst [vmem:[%s334] sm:$0xf] %v437
        %s439 = sand.u32 %s166, 1
        %s440 = scalar_lea.sflag [#allocation5], %s439
        %s441 = sand.u32 %s166, 1
        %s442 = smul.addr %s441, 4
        %s443 = scalar_lea.vmem [#allocation4], %s442
        // Predicated region
        $region82: #{tpu_custom_call.1} parent=76 // pred_check
          %p444 = pneg %p176
        $region83: #{tpu_custom_call.1} parent=76 // pred_check_branch
          %446 = sbr.rel (%p444) target = $region85
        $region84: #{tpu_custom_call.1} parent=76 // pred_region
          %s448 = ssub.s32 64, 64
          %449 = vsyncadd %s440, %s448
          %s450 = smul.addr %s24, 2
          %s451 = sadd.s32 %s25, %s450
          %s452 = smul.addr %s451, 64
          %s453 = scalar_lea.hbm %s5, %s452
          %s455 = sshll.u32 %s443, 4
          %s456 = int_to_ptr.vmem [resolvable:$true] %s455
          %458 = dma.vmem_to_hbm [thread:$0]  %s456, 64, %s453, %s440
        $region85: #{tpu_custom_call.1} parent=76 // pred_fallthru
          _
      $region77: #{tpu_custom_call.1} parent=5 // pred_fallthru
        _
      %p459 = scmp.le.s32.totalorder 2, %s15
      // Predicated region
      $region86: #{tpu_custom_call.1} parent=5 // pred_check
        %p460 = pneg %p459
      $region87: #{tpu_custom_call.1} parent=5 // pred_check_branch
        %462 = sbr.rel (%p460) target = $region89
      $region88: #{tpu_custom_call.1} parent=5 // pred_region
        %s463 = ssub.s32 %s15, 2
        // Predicated region
        $region90: #{tpu_custom_call.1} parent=88 // pred_check
          %p464 = pneg %p182
        $region91: #{tpu_custom_call.1} parent=88 // pred_check_branch
          %466 = sbr.rel (%p464) target = $region93
        $region92: #{tpu_custom_call.1} parent=88 // pred_region
          %s467 = sand.u32 %s167, 1
          %s468 = scalar_lea.sflag [#allocation5], %s467
          %s469 = sand.u32 %s167, 1
          %s470 = smul.addr %s469, 4
          %s471 = scalar_lea.vmem [#allocation4], %s470
          %472 = dma.done %s468, 64
        $region93: #{tpu_custom_call.1} parent=88 // pred_fallthru
          _
      $region89: #{tpu_custom_call.1} parent=5 // pred_fallthru
        _
    $region6: #{tpu_custom_call.1} parent=1 // loop_footer
      %s19 = sadd.s32 1, %s15
    $region7: #{tpu_custom_call.1} parent=1 // loop_footer_branch
      %14 = sbr.rel target = $region3
    $region8: #{tpu_custom_call.1} parent=1 // loop_exit
      _
    %473 = vsyncpa [#allocation5], 1
    %s474 = scalar_lea.sflag [#allocation5], 1
    %475 = vsyncpa %s474, 1

</llo_original>
